<compile_context>
chip_gen: v5e
topology: v5e:2x2
jax: 0.10.0
libtpu: 0.0.40
codegen_flags: <defaults>
</compile_context>

<pallas_src>
import functools

import jax
import jax.numpy as jnp
from jax.experimental import pallas as pl
from jax.experimental.pallas import tpu as pltpu


def _gridpg_kernel(p_ref, wc_ref, bc_ref, wl_ref, bl_ref, o_ref, *, hw):
    # p_ref : (Bblk, HW, KPAD)  bf16 im2col patches (K zero-padded to 128 lanes)
    # wc_ref: (KPAD, Cmid)      bf16 conv weight (rows past K are zero)
    # bc_ref: (1, Cmid)         f32 conv bias
    # wl_ref: (Cmid, NC)        bf16 classifier ("classifier kernel") weight
    # bl_ref: (1, NC)           f32 classifier bias
    # o_ref : (Bblk, NC)        f32 logits for this batch block
    bblk = p_ref.shape[0]
    kpad = p_ref.shape[2]
    cmid = wc_ref.shape[1]

    patches = p_ref[...].reshape(bblk * hw, kpad)         # leading-dim merge, no relayout

    # 3x3 'same' conv as a single K=KPAD matmul, f32 accumulation inside the MXU.
    feats = jnp.dot(patches, wc_ref[...], preferred_element_type=jnp.float32)
    feats = jnp.maximum(feats + bc_ref[...], 0.0)          # bias + ReLU (f32, VPU)

    # Global average pool over the spatial axis.
    pool = jnp.sum(feats.reshape(bblk, hw, cmid), axis=1) * (1.0 / hw)   # (Bblk, Cmid) f32

    # Classifier head: bf16 x bf16, f32 accumulation.
    logits = jnp.dot(pool.astype(jnp.bfloat16), wl_ref[...],
                     preferred_element_type=jnp.float32) + bl_ref[...]
    o_ref[...] = logits                                     # one (Bblk, NC) store


def _pick_block_b(B):
    """Batch elements per grid step.

    v5e/v6e have a single TensorCore, so the grid is a purely sequential loop and
    splitting a tiny batch only adds ~0.35us fixed per-step overhead -> one step.
    v7x has 2 TensorCores, but per-image work here (~0.6 MFLOP) is far below the
    per-step overhead, so only shard across cores once the batch is big enough to
    amortize it (keeping the sub-block a multiple of 8 sublanes).
    """
    try:
        kind = jax.devices()[0].device_kind.lower()
    except Exception:  # pragma: no cover - defensive on exotic backends
        kind = ""
    two_cores = ("v7" in kind) or ("7x" in kind)
    if two_cores and B >= 16 and (B // 2) % 8 == 0:
        return B // 2
    return B


@jax.jit
def gridpg_forward(x_nchw, conv_w, conv_b, cls_w, cls_b):
    """GridPGContainer.forward: backbone features -> global avg pool -> logits.

    x_nchw : (B, Cin, H, W)    float32 (PyTorch NCHW convention)
    conv_w : (3, 3, Cin, Cmid) 3x3 conv weight (HWIO)
    conv_b : (Cmid,)
    cls_w  : (Cmid, NC)        classifier ("classifier kernel") weight
    cls_b  : (NC,)
    returns: (B, NC) logits
    """
    x_nhwc = jnp.transpose(x_nchw, (0, 2, 3, 1))
    B, H, W, Cin = x_nhwc.shape
    KH, KW, _, Cmid = conv_w.shape
    NC = cls_w.shape[1]
    HW = H * W
    K = KH * KW * Cin
    KPAD = ((K + 127) // 128) * 128   # lane-dense minor dim (36 -> 128)

    # Wrapper-side im2col (jitted, fused into the pallas_call feed). Patch column order
    # is (dh, dw, cin), matching conv_w.reshape(KH*KW*Cin, Cmid).
    xp = jnp.pad(x_nhwc, ((0, 0), (1, 1), (1, 1), (0, 0)))
    cols = [xp[:, dh:dh + H, dw:dw + W, :] for dh in range(KH) for dw in range(KW)]
    patches = jnp.concatenate(cols, axis=-1).reshape(B, HW, K)
    patches = jnp.pad(patches, ((0, 0), (0, 0), (0, KPAD - K))).astype(jnp.bfloat16)

    wc = jnp.pad(conv_w.reshape(K, Cmid), ((0, KPAD - K), (0, 0))).astype(jnp.bfloat16)
    wl = cls_w.astype(jnp.bfloat16)
    bc = conv_b.reshape(1, Cmid).astype(jnp.float32)
    bl = cls_b.reshape(1, NC).astype(jnp.float32)

    bblk = _pick_block_b(B)
    nsteps = B // bblk

    # VMEM budget: pipelined inputs/outputs are double-buffered (x2) plus f32 scratch
    # for the feature map.  Floor 16 MiB; cap 48 MiB so we never exceed v7x's 64 MiB
    # physical VMEM even if shapes scale.
    block_bytes = (bblk * HW * KPAD * 2                 # patches block (bf16)
                   + KPAD * Cmid * 2                    # conv weight (bf16)
                   + Cmid * 4 + Cmid * NC * 2 + NC * 4  # biases + classifier weight
                   + bblk * NC * 4)                     # output block
    scratch_bytes = 3 * bblk * HW * Cmid * 4            # feats / intermediates (f32)
    vmem_limit = int(min(48 << 20,
                         max(16 << 20, 2 * block_bytes + scratch_bytes + (2 << 20))))

    flops = 2 * B * HW * K * Cmid + 2 * B * Cmid * NC
    bytes_accessed = (patches.size * 2 + wc.size * 2 + wl.size * 2
                      + bc.size * 4 + bl.size * 4 + B * NC * 4)

    kernel = functools.partial(_gridpg_kernel, hw=HW)
    out = pl.pallas_call(
        kernel,
        out_shape=jax.ShapeDtypeStruct((B, NC), jnp.float32),
        grid_spec=pltpu.PrefetchScalarGridSpec(
            num_scalar_prefetch=0,
            grid=(nsteps,),
            in_specs=[
                pl.BlockSpec((bblk, HW, KPAD), lambda b: (b, 0, 0)),
                pl.BlockSpec((KPAD, Cmid), lambda b: (0, 0)),
                pl.BlockSpec((1, Cmid), lambda b: (0, 0)),
                pl.BlockSpec((Cmid, NC), lambda b: (0, 0)),
                pl.BlockSpec((1, NC), lambda b: (0, 0)),
            ],
            out_specs=pl.BlockSpec((bblk, NC), lambda b: (b, 0)),
        ),
        compiler_params=pltpu.CompilerParams(
            dimension_semantics=("parallel",),
            vmem_limit_bytes=vmem_limit),
        cost_estimate=pl.CostEstimate(
            flops=int(flops), transcendentals=0, bytes_accessed=int(bytes_accessed)),
    )(patches, wc, bc, wl, bl)
    return out


def _reference(x_nchw, conv_w, conv_b, cls_w, cls_b):
    """Pure-JAX reference mirroring the kernel's bf16 rounding of streamed operands."""
    x = jnp.transpose(x_nchw, (0, 2, 3, 1)).astype(jnp.bfloat16).astype(jnp.float32)
    B, H, W, Cin = x.shape
    KH, KW, _, Cmid = conv_w.shape
    xp = jnp.pad(x, ((0, 0), (1, 1), (1, 1), (0, 0)))
    cols = [xp[:, dh:dh + H, dw:dw + W, :] for dh in range(KH) for dw in range(KW)]
    patches = jnp.concatenate(cols, axis=-1).reshape(B, H * W, KH * KW * Cin)
    w = conv_w.reshape(KH * KW * Cin, Cmid).astype(jnp.bfloat16).astype(jnp.float32)
    feats = jnp.maximum(
        jnp.einsum("bpk,kc->bpc", patches, w,
                   precision=jax.lax.Precision.HIGHEST) + conv_b[None, None, :], 0.0)
    pool = feats.mean(axis=1).astype(jnp.bfloat16).astype(jnp.float32)  # mirror kernel cast
    wl = cls_w.astype(jnp.bfloat16).astype(jnp.float32)
    return jnp.einsum("bc,cn->bn", pool, wl,
                      precision=jax.lax.Precision.HIGHEST) + cls_b[None, :]


if __name__ == "__main__":
    # Small shapes consistent with the module's CNN-style forward (scale=2 grid setting).
    B, Cin, H, W = 2, 4, 16, 16
    Cmid, NC = 32, 8

    key = jax.random.PRNGKey(0)
    k_x, k_wc, k_bc, k_wl, k_bl = jax.random.split(key, 5)
    x = jax.random.normal(k_x, (B, Cin, H, W), dtype=jnp.float32)
    conv_w = jax.random.normal(k_wc, (3, 3, Cin, Cmid), dtype=jnp.float32) * 0.1
    conv_b = jax.random.normal(k_bc, (Cmid,), dtype=jnp.float32) * 0.1
    cls_w = jax.random.normal(k_wl, (Cmid, NC), dtype=jnp.float32) * 0.1
    cls_b = jax.random.normal(k_bl, (NC,), dtype=jnp.float32) * 0.1

    # TODO(synk): the abstract ModelBase's start_layer/end_layer slicing and
    # enable_classifier_kernel() (1x1-conv classifier applied spatially) have no concrete
    # definition; with global average pooling the pool->linear order used here is
    # mathematically equivalent for the logits path.

    logits = gridpg_forward(x, conv_w, conv_b, cls_w, cls_b)
    jax.block_until_ready(logits)

    ref = _reference(x, conv_w, conv_b, cls_w, cls_b)
    assert logits.shape == (B, NC)
    err = float(jnp.max(jnp.abs(logits - ref)))
    assert err < 2e-3, f"max abs err = {err}"

    print("KERNEL_OK")
</pallas_src>

<mosaic_0001>
module attributes {stable_mosaic.version = 11 : i64} {
  func.func @_gridpg_kernel(%arg0: i32, %arg1: memref<2x256x128xbf16, #tpu.memory_space<vmem>>, %arg2: memref<128x32xbf16, #tpu.memory_space<vmem>>, %arg3: memref<1x32xf32, #tpu.memory_space<vmem>>, %arg4: memref<32x8xbf16, #tpu.memory_space<vmem>>, %arg5: memref<1x8xf32, #tpu.memory_space<vmem>>, %arg6: memref<2x8xf32, #tpu.memory_space<vmem>>) attributes {dimension_semantics = [#tpu.dimension_semantics<parallel>], iteration_bounds = array<i64: 1>, scalar_prefetch = 0 : i64, scratch_operands = 0 : i64, tpu.core_type = #tpu.core_type<tc>, window_params = [{transform_indices = @transform_0, window_bounds = array<i64: 2, 256, 128>}, {pipeline_mode = #tpu.pipeline_mode<synchronous>, transform_indices = @transform_1, window_bounds = array<i64: 128, 32>}, {pipeline_mode = #tpu.pipeline_mode<synchronous>, transform_indices = @transform_2, window_bounds = array<i64: 1, 32>}, {pipeline_mode = #tpu.pipeline_mode<synchronous>, transform_indices = @transform_3, window_bounds = array<i64: 32, 8>}, {pipeline_mode = #tpu.pipeline_mode<synchronous>, transform_indices = @transform_4, window_bounds = array<i64: 1, 8>}, {transform_indices = @transform_5, window_bounds = array<i64: 2, 8>}]} {
    %c0 = arith.constant 0 : index
    %c0_0 = arith.constant 0 : index
    %c0_1 = arith.constant 0 : index
    %0 = vector.load %arg1[%c0, %c0_0, %c0_1] : memref<2x256x128xbf16, #tpu.memory_space<vmem>>, vector<2x256x128xbf16>
    %1 = vector.shape_cast %0 : vector<2x256x128xbf16> to vector<512x128xbf16>
    %c0_2 = arith.constant 0 : index
    %c0_3 = arith.constant 0 : index
    %2 = vector.load %arg2[%c0_2, %c0_3] : memref<128x32xbf16, #tpu.memory_space<vmem>>, vector<128x32xbf16>
    %cst = arith.constant dense<0.000000e+00> : vector<512x32xf32>
    %3 = tpu.matmul %1, %2, %cst {dimension_numbers = #tpu.dot_dimension_numbers<[1], [0], [0], [1], [0, 0, 1, 1], [], []>} : vector<512x128xbf16>, vector<128x32xbf16>, vector<512x32xf32> -> vector<512x32xf32>
    %c0_4 = arith.constant 0 : index
    %c0_5 = arith.constant 0 : index
    %4 = vector.load %arg3[%c0_4, %c0_5] : memref<1x32xf32, #tpu.memory_space<vmem>>, vector<1x32xf32>
    %5 = vector.broadcast %4 : vector<1x32xf32> to vector<512x32xf32>
    %6 = arith.addf %3, %5 : vector<512x32xf32>
    %cst_6 = arith.constant 0.000000e+00 : f32
    %7 = vector.broadcast %cst_6 : f32 to vector<512x32xf32>
    %8 = arith.maximumf %6, %7 : vector<512x32xf32>
    %9 = vector.shape_cast %8 : vector<512x32xf32> to vector<2x256x32xf32>
    %cst_7 = arith.constant dense<0.000000e+00> : vector<2x32xf32>
    %10 = vector.multi_reduction <add>, %9, %cst_7 [1] : vector<2x256x32xf32> to vector<2x32xf32>
    %cst_8 = arith.constant 3.906250e-03 : f32
    %11 = vector.broadcast %cst_8 : f32 to vector<2x32xf32>
    %12 = arith.mulf %10, %11 : vector<2x32xf32>
    %13 = arith.truncf %12 : vector<2x32xf32> to vector<2x32xbf16>
    %c0_9 = arith.constant 0 : index
    %c0_10 = arith.constant 0 : index
    %14 = vector.load %arg4[%c0_9, %c0_10] : memref<32x8xbf16, #tpu.memory_space<vmem>>, vector<32x8xbf16>
    %cst_11 = arith.constant dense<0.000000e+00> : vector<2x8xf32>
    %15 = tpu.matmul %13, %14, %cst_11 {dimension_numbers = #tpu.dot_dimension_numbers<[1], [0], [0], [1], [0, 0, 1, 1], [], []>} : vector<2x32xbf16>, vector<32x8xbf16>, vector<2x8xf32> -> vector<2x8xf32>
    %c0_12 = arith.constant 0 : index
    %c0_13 = arith.constant 0 : index
    %16 = vector.load %arg5[%c0_12, %c0_13] : memref<1x8xf32, #tpu.memory_space<vmem>>, vector<1x8xf32>
    %17 = vector.broadcast %16 : vector<1x8xf32> to vector<2x8xf32>
    %18 = arith.addf %15, %17 : vector<2x8xf32>
    %c0_14 = arith.constant 0 : index
    %c0_15 = arith.constant 0 : index
    %19 = vector.load %arg6[%c0_14, %c0_15] : memref<2x8xf32, #tpu.memory_space<vmem>>, vector<2x8xf32>
    tpu.vector_store %arg6[%c0_14, %c0_15], %18 {strides = array<i32>} : memref<2x8xf32, #tpu.memory_space<vmem>>, vector<2x8xf32>,
    return
  }
  func.func @transform_0(%arg0: i32) -> (i32, i32, i32) {
    %c0_i32 = arith.constant 0 : i32
    %c0_i32_0 = arith.constant 0 : i32
    %c0_i32_1 = arith.constant 0 : i32
    return %arg0, %c0_i32, %c0_i32_0 : i32, i32, i32
  }
  func.func @transform_1(%arg0: i32) -> (i32, i32) {
    %c0_i32 = arith.constant 0 : i32
    %c0_i32_0 = arith.constant 0 : i32
    %c0_i32_1 = arith.constant 0 : i32
    return %c0_i32, %c0_i32_0 : i32, i32
  }
  func.func @transform_2(%arg0: i32) -> (i32, i32) {
    %c0_i32 = arith.constant 0 : i32
    %c0_i32_0 = arith.constant 0 : i32
    %c0_i32_1 = arith.constant 0 : i32
    return %c0_i32, %c0_i32_0 : i32, i32
  }
  func.func @transform_3(%arg0: i32) -> (i32, i32) {
    %c0_i32 = arith.constant 0 : i32
    %c0_i32_0 = arith.constant 0 : i32
    %c0_i32_1 = arith.constant 0 : i32
    return %c0_i32, %c0_i32_0 : i32, i32
  }
  func.func @transform_4(%arg0: i32) -> (i32, i32) {
    %c0_i32 = arith.constant 0 : i32
    %c0_i32_0 = arith.constant 0 : i32
    %c0_i32_1 = arith.constant 0 : i32
    return %c0_i32, %c0_i32_0 : i32, i32
  }
  func.func @transform_5(%arg0: i32) -> (i32, i32) {
    %c0_i32 = arith.constant 0 : i32
    %c0_i32_0 = arith.constant 0 : i32
    return %arg0, %c0_i32 : i32, i32
  }
}

</mosaic_0001>

<llo_original>
// kernel: gridpg_forward.1
$region0: #{gridpg_forward.1}
  #allocation0 [shape = 'u32[]', space=smem, size = 0x4, offset = 0x4, fixed_abs, tag = 'smem constant byte address 0x4 - core index']
  #allocation1 [shape = 'u32[72,128]{1,0:T(1,128)}', space=vmem, size = 0x9000, scoped, tag = 'internal scratch']
  %s0 = inlined_call_operand.vmem [shape: bf16[2,256,128], index: 0, kind: input, shape index: {}]
  %s1 = inlined_call_operand.vmem [shape: bf16[128,32], index: 1, kind: input, shape index: {}]
  %s2 = inlined_call_operand.vmem [shape: f32[1,32], index: 2, kind: input, shape index: {}]
  %s3 = inlined_call_operand.vmem [shape: bf16[32,8], index: 3, kind: input, shape index: {}]
  %s4 = inlined_call_operand.vmem [shape: f32[1,8], index: 4, kind: input, shape index: {}]
  %s5 = inlined_call_operand.hbm [shape: f32[2,8], index: 5, kind: output, shape index: {}]
  %s6 = sld [smem:[#allocation0]]
  $region30: #{gridpg_forward.1} parent=0
    _
  %s8 = ssub.s32 1, %s6
  %s9 = scalar_select 0, %s8, %s6
  $region1: #{gridpg_forward.1} parent=0
    #allocation2 [shape = 'u8[1024]{0}', space=vmem, size = 0x400, scoped, tag = 'output window, operand 0, single buffered']
    #allocation3 [shape = 's32[1]{0}', space=sflag, size = 0x4, scoped, tag = 'scoped memory for gridpg_forward.1']
    %10 = vsyncpa [#allocation3], 0
    // Predicated region
    $region2: #{gridpg_forward.1} parent=1 // pred_check
      _
    $region3: #{gridpg_forward.1} parent=1 // pred_check_branch
      %12 = sbr.rel (0) target = $region5
    $region4: #{gridpg_forward.1} parent=1 // pred_region
      _
    $region5: #{gridpg_forward.1} parent=1 // pred_fallthru
      _
    // Predicated region
    $region6: #{gridpg_forward.1} parent=1 // pred_check
      _
    $region7: #{gridpg_forward.1} parent=1 // pred_check_branch
      %14 = sbr.rel (0) target = $region9
    $region8: #{gridpg_forward.1} parent=1 // pred_region
      _
    $region9: #{gridpg_forward.1} parent=1 // pred_fallthru
      _
    // Predicated region
    $region10: #{gridpg_forward.1} parent=1 // pred_check
      _
    $region11: #{gridpg_forward.1} parent=1 // pred_check_branch
      %16 = sbr.rel (0) target = $region13
    $region12: #{gridpg_forward.1} parent=1 // pred_region
      _
    $region13: #{gridpg_forward.1} parent=1 // pred_fallthru
      _
    // Predicated region
    $region14: #{gridpg_forward.1} parent=1 // pred_check
      _
    $region15: #{gridpg_forward.1} parent=1 // pred_check_branch
      %18 = sbr.rel (0) target = $region17
    $region16: #{gridpg_forward.1} parent=1 // pred_region
      _
    $region17: #{gridpg_forward.1} parent=1 // pred_fallthru
      _
    // Predicated region
    $region18: #{gridpg_forward.1} parent=1 // pred_check
      _
    $region19: #{gridpg_forward.1} parent=1 // pred_check_branch
      %20 = sbr.rel (0) target = $region21
    $region20: #{gridpg_forward.1} parent=1 // pred_region
      _
    $region21: #{gridpg_forward.1} parent=1 // pred_fallthru
      _
    %v22 = vld [vmem:[%s0] sm:$0xf]
    %v23 = vld [vmem:[%s0 + $0x4] sm:$0xf]
    %v24 = vld [vmem:[%s0 + $0x8] sm:$0xf]
    %v25 = vld [vmem:[%s0 + $0xc] sm:$0xf]
    %v26 = vld [vmem:[%s0 + $0x10] sm:$0xf]
    %v27 = vld [vmem:[%s0 + $0x14] sm:$0xf]
    %v28 = vld [vmem:[%s0 + $0x18] sm:$0xf]
    %v29 = vld [vmem:[%s0 + $0x1c] sm:$0xf]
    %v30 = vld [vmem:[%s0 + $0x20] sm:$0xf]
    %v31 = vld [vmem:[%s0 + $0x24] sm:$0xf]
    %v32 = vld [vmem:[%s0 + $0x28] sm:$0xf]
    %v33 = vld [vmem:[%s0 + $0x2c] sm:$0xf]
    %v34 = vld [vmem:[%s0 + $0x30] sm:$0xf]
    %v35 = vld [vmem:[%s0 + $0x34] sm:$0xf]
    %v36 = vld [vmem:[%s0 + $0x38] sm:$0xf]
    %v37 = vld [vmem:[%s0 + $0x3c] sm:$0xf]
    %v38 = vld [vmem:[%s0 + $0x40] sm:$0xf]
    %v39 = vld [vmem:[%s0 + $0x44] sm:$0xf]
    %v40 = vld [vmem:[%s0 + $0x48] sm:$0xf]
    %v41 = vld [vmem:[%s0 + $0x4c] sm:$0xf]
    %v42 = vld [vmem:[%s0 + $0x50] sm:$0xf]
    %v43 = vld [vmem:[%s0 + $0x54] sm:$0xf]
    %v44 = vld [vmem:[%s0 + $0x58] sm:$0xf]
    %v45 = vld [vmem:[%s0 + $0x5c] sm:$0xf]
    %v46 = vld [vmem:[%s0 + $0x60] sm:$0xf]
    %v47 = vld [vmem:[%s0 + $0x64] sm:$0xf]
    %v48 = vld [vmem:[%s0 + $0x68] sm:$0xf]
    %v49 = vld [vmem:[%s0 + $0x6c] sm:$0xf]
    %v50 = vld [vmem:[%s0 + $0x70] sm:$0xf]
    %v51 = vld [vmem:[%s0 + $0x74] sm:$0xf]
    %v52 = vld [vmem:[%s0 + $0x78] sm:$0xf]
    %v53 = vld [vmem:[%s0 + $0x7c] sm:$0xf]
    %v54 = vld [vmem:[%s0 + $0x80] sm:$0xf]
    %v55 = vld [vmem:[%s0 + $0x84] sm:$0xf]
    %v56 = vld [vmem:[%s0 + $0x88] sm:$0xf]
    %v57 = vld [vmem:[%s0 + $0x8c] sm:$0xf]
    %v58 = vld [vmem:[%s0 + $0x90] sm:$0xf]
    %v59 = vld [vmem:[%s0 + $0x94] sm:$0xf]
    %v60 = vld [vmem:[%s0 + $0x98] sm:$0xf]
    %v61 = vld [vmem:[%s0 + $0x9c] sm:$0xf]
    %v62 = vld [vmem:[%s0 + $0xa0] sm:$0xf]
    %v63 = vld [vmem:[%s0 + $0xa4] sm:$0xf]
    %v64 = vld [vmem:[%s0 + $0xa8] sm:$0xf]
    %v65 = vld [vmem:[%s0 + $0xac] sm:$0xf]
    %v66 = vld [vmem:[%s0 + $0xb0] sm:$0xf]
    %v67 = vld [vmem:[%s0 + $0xb4] sm:$0xf]
    %v68 = vld [vmem:[%s0 + $0xb8] sm:$0xf]
    %v69 = vld [vmem:[%s0 + $0xbc] sm:$0xf]
    %v70 = vld [vmem:[%s0 + $0xc0] sm:$0xf]
    %v71 = vld [vmem:[%s0 + $0xc4] sm:$0xf]
    %v72 = vld [vmem:[%s0 + $0xc8] sm:$0xf]
    %v73 = vld [vmem:[%s0 + $0xcc] sm:$0xf]
    %v74 = vld [vmem:[%s0 + $0xd0] sm:$0xf]
    %v75 = vld [vmem:[%s0 + $0xd4] sm:$0xf]
    %v76 = vld [vmem:[%s0 + $0xd8] sm:$0xf]
    %v77 = vld [vmem:[%s0 + $0xdc] sm:$0xf]
    %v78 = vld [vmem:[%s0 + $0xe0] sm:$0xf]
    %v79 = vld [vmem:[%s0 + $0xe4] sm:$0xf]
    %v80 = vld [vmem:[%s0 + $0xe8] sm:$0xf]
    %v81 = vld [vmem:[%s0 + $0xec] sm:$0xf]
    %v82 = vld [vmem:[%s0 + $0xf0] sm:$0xf]
    %v83 = vld [vmem:[%s0 + $0xf4] sm:$0xf]
    %v84 = vld [vmem:[%s0 + $0xf8] sm:$0xf]
    %v85 = vld [vmem:[%s0 + $0xfc] sm:$0xf]
    %v86 = vld [vmem:[%s1] sm:$0xf]
    %v87 = vld [vmem:[%s1 + $0x4] sm:$0xf]
    %v88 = vld [vmem:[%s1 + $0x8] sm:$0xf]
    %v89 = vld [vmem:[%s1 + $0xc] sm:$0xf]
    %v90 = vld [vmem:[%s1 + $0x10] sm:$0xf]
    %v91 = vld [vmem:[%s1 + $0x14] sm:$0xf]
    %v92 = vld [vmem:[%s1 + $0x18] sm:$0xf]
    %v93 = vld [vmem:[%s1 + $0x1c] sm:$0xf]
    %v94 = vld [vmem:[%s1 + $0x20] sm:$0xf]
    %v95 = vld [vmem:[%s1 + $0x24] sm:$0xf]
    %v96 = vld [vmem:[%s1 + $0x28] sm:$0xf]
    %v97 = vld [vmem:[%s1 + $0x2c] sm:$0xf]
    %v98 = vld [vmem:[%s1 + $0x30] sm:$0xf]
    %v99 = vld [vmem:[%s1 + $0x34] sm:$0xf]
    %v100 = vld [vmem:[%s1 + $0x38] sm:$0xf]
    %v101 = vld [vmem:[%s1 + $0x3c] sm:$0xf]
    %v102 = vld [vmem:[%s2] sm:$0x1]
    %v104 = vperm.slane %v102, 0
    %v170 = vunpack.c.l.b16 %v22
    %v171 = vunpack.c.l.b16 %v23
    %v172 = vunpack.c.l.b16 %v24
    %v173 = vunpack.c.l.b16 %v25
    %v174 = vunpack.c.l.b16 %v26
    %v175 = vunpack.c.l.b16 %v27
    %v176 = vunpack.c.l.b16 %v28
    %v177 = vunpack.c.l.b16 %v29
    %v178 = vunpack.c.l.b16 %v30
    %v179 = vunpack.c.l.b16 %v31
    %v180 = vunpack.c.l.b16 %v32
    %v181 = vunpack.c.l.b16 %v33
    %v182 = vunpack.c.l.b16 %v34
    %v183 = vunpack.c.l.b16 %v35
    %v184 = vunpack.c.l.b16 %v36
    %v185 = vunpack.c.l.b16 %v37
    %v186 = vunpack.c.l.b16 %v38
    %v187 = vunpack.c.l.b16 %v39
    %v188 = vunpack.c.l.b16 %v40
    %v189 = vunpack.c.l.b16 %v41
    %v190 = vunpack.c.l.b16 %v42
    %v191 = vunpack.c.l.b16 %v43
    %v192 = vunpack.c.l.b16 %v44
    %v193 = vunpack.c.l.b16 %v45
    %v194 = vunpack.c.l.b16 %v46
    %v195 = vunpack.c.l.b16 %v47
    %v196 = vunpack.c.l.b16 %v48
    %v197 = vunpack.c.l.b16 %v49
    %v198 = vunpack.c.l.b16 %v50
    %v199 = vunpack.c.l.b16 %v51
    %v200 = vunpack.c.l.b16 %v52
    %v201 = vunpack.c.l.b16 %v53
    %v202 = vunpack.c.l.b16 %v54
    %v203 = vunpack.c.l.b16 %v55
    %v204 = vunpack.c.l.b16 %v56
    %v205 = vunpack.c.l.b16 %v57
    %v206 = vunpack.c.l.b16 %v58
    %v207 = vunpack.c.l.b16 %v59
    %v208 = vunpack.c.l.b16 %v60
    %v209 = vunpack.c.l.b16 %v61
    %v210 = vunpack.c.l.b16 %v62
    %v211 = vunpack.c.l.b16 %v63
    %v212 = vunpack.c.l.b16 %v64
    %v213 = vunpack.c.l.b16 %v65
    %v214 = vunpack.c.l.b16 %v66
    %v215 = vunpack.c.l.b16 %v67
    %v216 = vunpack.c.l.b16 %v68
    %v217 = vunpack.c.l.b16 %v69
    %v218 = vunpack.c.l.b16 %v70
    %v219 = vunpack.c.l.b16 %v71
    %v220 = vunpack.c.l.b16 %v72
    %v221 = vunpack.c.l.b16 %v73
    %v222 = vunpack.c.l.b16 %v74
    %v223 = vunpack.c.l.b16 %v75
    %v224 = vunpack.c.l.b16 %v76
    %v225 = vunpack.c.l.b16 %v77
    %v226 = vunpack.c.l.b16 %v78
    %v227 = vunpack.c.l.b16 %v79
    %v228 = vunpack.c.l.b16 %v80
    %v229 = vunpack.c.l.b16 %v81
    %v230 = vunpack.c.l.b16 %v82
    %v231 = vunpack.c.l.b16 %v83
    %v232 = vunpack.c.l.b16 %v84
    %v233 = vunpack.c.l.b16 %v85
    %v234 = vpack.c.b16 %v171, %v170
    %v235 = vpack.c.b16 %v173, %v172
    %v236 = vpack.c.b16 %v175, %v174
    %v237 = vpack.c.b16 %v177, %v176
    %v238 = vpack.c.b16 %v179, %v178
    %v239 = vpack.c.b16 %v181, %v180
    %v240 = vpack.c.b16 %v183, %v182
    %v241 = vpack.c.b16 %v185, %v184
    %v242 = vpack.c.b16 %v187, %v186
    %v243 = vpack.c.b16 %v189, %v188
    %v244 = vpack.c.b16 %v191, %v190
    %v245 = vpack.c.b16 %v193, %v192
    %v246 = vpack.c.b16 %v195, %v194
    %v247 = vpack.c.b16 %v197, %v196
    %v248 = vpack.c.b16 %v199, %v198
    %v249 = vpack.c.b16 %v201, %v200
    %v250 = vpack.c.b16 %v203, %v202
    %v251 = vpack.c.b16 %v205, %v204
    %v252 = vpack.c.b16 %v207, %v206
    %v253 = vpack.c.b16 %v209, %v208
    %v254 = vpack.c.b16 %v211, %v210
    %v255 = vpack.c.b16 %v213, %v212
    %v256 = vpack.c.b16 %v215, %v214
    %v257 = vpack.c.b16 %v217, %v216
    %v258 = vpack.c.b16 %v219, %v218
    %v259 = vpack.c.b16 %v221, %v220
    %v260 = vpack.c.b16 %v223, %v222
    %v261 = vpack.c.b16 %v225, %v224
    %v262 = vpack.c.b16 %v227, %v226
    %v263 = vpack.c.b16 %v229, %v228
    %v264 = vpack.c.b16 %v231, %v230
    %v265 = vpack.c.b16 %v233, %v232
    %v314 = vunpack.c.l.b16 %v86
    %v315 = vunpack.c.l.b16 %v87
    %v316 = vunpack.c.l.b16 %v88
    %v317 = vunpack.c.l.b16 %v89
    %v318 = vunpack.c.l.b16 %v90
    %v319 = vunpack.c.l.b16 %v91
    %v320 = vunpack.c.l.b16 %v92
    %v321 = vunpack.c.l.b16 %v93
    %v322 = vunpack.c.l.b16 %v94
    %v323 = vunpack.c.l.b16 %v95
    %v324 = vunpack.c.l.b16 %v96
    %v325 = vunpack.c.l.b16 %v97
    %v326 = vunpack.c.l.b16 %v98
    %v327 = vunpack.c.l.b16 %v99
    %v328 = vunpack.c.l.b16 %v100
    %v329 = vunpack.c.l.b16 %v101
    %v330 = vpack.c.b16 %v315, %v314
    %v331 = vpack.c.b16 %v317, %v316
    %v332 = vpack.c.b16 %v319, %v318
    %v333 = vpack.c.b16 %v321, %v320
    %v334 = vpack.c.b16 %v323, %v322
    %v335 = vpack.c.b16 %v325, %v324
    %v336 = vpack.c.b16 %v327, %v326
    %v337 = vpack.c.b16 %v329, %v328
    %346 = vmatpush.bf16.msra.mxu0 %v337
    %347 = vmatpush.bf16.msra.mxu0 %v336
    %348 = vmatpush.bf16.msra.mxu0 %v335
    %349 = vmatpush.bf16.msra.mxu0 %v334
    %350 = vmatpush.bf16.msra.mxu0 %v333
    %351 = vmatpush.bf16.msra.mxu0 %v332
    %352 = vmatpush.bf16.msra.mxu0 %v331
    %353 = vmatpush.bf16.msra.mxu0 %v330
    %354 = vmatmul.bf16.gmra.mxu0 %v234
    %v355 = vpop.f32.mrf.mxu0
    %v356 = vadd.f32 %v104, %v355
    %v357 = vpop.f32.mrf.mxu0
    %v358 = vadd.f32 %v104, %v357
    %359 = vmatmul.bf16.gmra.mxu0 %v235
    %v360 = vpop.f32.mrf.mxu0
    %v361 = vadd.f32 %v104, %v360
    %v362 = vpop.f32.mrf.mxu0
    %v363 = vadd.f32 %v104, %v362
    %364 = vmatmul.bf16.gmra.mxu0 %v236
    %v365 = vpop.f32.mrf.mxu0
    %v366 = vadd.f32 %v104, %v365
    %v367 = vpop.f32.mrf.mxu0
    %v368 = vadd.f32 %v104, %v367
    %369 = vmatmul.bf16.gmra.mxu0 %v237
    %v370 = vpop.f32.mrf.mxu0
    %v371 = vadd.f32 %v104, %v370
    %v372 = vpop.f32.mrf.mxu0
    %v373 = vadd.f32 %v104, %v372
    %374 = vmatmul.bf16.gmra.mxu0 %v238
    %v375 = vpop.f32.mrf.mxu0
    %v376 = vadd.f32 %v104, %v375
    %v377 = vpop.f32.mrf.mxu0
    %v378 = vadd.f32 %v104, %v377
    %379 = vmatmul.bf16.gmra.mxu0 %v239
    %v380 = vpop.f32.mrf.mxu0
    %v381 = vadd.f32 %v104, %v380
    %v382 = vpop.f32.mrf.mxu0
    %v383 = vadd.f32 %v104, %v382
    %384 = vmatmul.bf16.gmra.mxu0 %v240
    %v385 = vpop.f32.mrf.mxu0
    %v386 = vadd.f32 %v104, %v385
    %v387 = vpop.f32.mrf.mxu0
    %v388 = vadd.f32 %v104, %v387
    %389 = vmatmul.bf16.gmra.mxu0 %v241
    %v390 = vpop.f32.mrf.mxu0
    %v391 = vadd.f32 %v104, %v390
    %v392 = vpop.f32.mrf.mxu0
    %v393 = vadd.f32 %v104, %v392
    %394 = vmatmul.bf16.gmra.mxu0 %v242
    %v395 = vpop.f32.mrf.mxu0
    %v396 = vadd.f32 %v104, %v395
    %v397 = vpop.f32.mrf.mxu0
    %v398 = vadd.f32 %v104, %v397
    %399 = vmatmul.bf16.gmra.mxu0 %v243
    %v400 = vpop.f32.mrf.mxu0
    %v401 = vadd.f32 %v104, %v400
    %v402 = vpop.f32.mrf.mxu0
    %v403 = vadd.f32 %v104, %v402
    %404 = vmatmul.bf16.gmra.mxu0 %v244
    %v405 = vpop.f32.mrf.mxu0
    %v406 = vadd.f32 %v104, %v405
    %v407 = vpop.f32.mrf.mxu0
    %v408 = vadd.f32 %v104, %v407
    %409 = vmatmul.bf16.gmra.mxu0 %v245
    %v410 = vpop.f32.mrf.mxu0
    %v411 = vadd.f32 %v104, %v410
    %v412 = vpop.f32.mrf.mxu0
    %v413 = vadd.f32 %v104, %v412
    %414 = vmatmul.bf16.gmra.mxu0 %v246
    %v415 = vpop.f32.mrf.mxu0
    %v416 = vadd.f32 %v104, %v415
    %v417 = vpop.f32.mrf.mxu0
    %v418 = vadd.f32 %v104, %v417
    %419 = vmatmul.bf16.gmra.mxu0 %v247
    %v420 = vpop.f32.mrf.mxu0
    %v421 = vadd.f32 %v104, %v420
    %v422 = vpop.f32.mrf.mxu0
    %v423 = vadd.f32 %v104, %v422
    %424 = vmatmul.bf16.gmra.mxu0 %v248
    %v425 = vpop.f32.mrf.mxu0
    %v426 = vadd.f32 %v104, %v425
    %v427 = vpop.f32.mrf.mxu0
    %v428 = vadd.f32 %v104, %v427
    %429 = vmatmul.bf16.gmra.mxu0 %v249
    %v430 = vpop.f32.mrf.mxu0
    %v431 = vadd.f32 %v104, %v430
    %v432 = vpop.f32.mrf.mxu0
    %v433 = vadd.f32 %v104, %v432
    %434 = vmatmul.bf16.gmra.mxu0 %v250
    %v435 = vpop.f32.mrf.mxu0
    %v436 = vadd.f32 %v104, %v435
    %v437 = vpop.f32.mrf.mxu0
    %v438 = vadd.f32 %v104, %v437
    %439 = vmatmul.bf16.gmra.mxu0 %v251
    %v440 = vpop.f32.mrf.mxu0
    %v441 = vadd.f32 %v104, %v440
    %v442 = vpop.f32.mrf.mxu0
    %v443 = vadd.f32 %v104, %v442
    %444 = vmatmul.bf16.gmra.mxu0 %v252
    %v445 = vpop.f32.mrf.mxu0
    %v446 = vadd.f32 %v104, %v445
    %v447 = vpop.f32.mrf.mxu0
    %v448 = vadd.f32 %v104, %v447
    %449 = vmatmul.bf16.gmra.mxu0 %v253
    %v450 = vpop.f32.mrf.mxu0
    %v451 = vadd.f32 %v104, %v450
    %v452 = vpop.f32.mrf.mxu0
    %v453 = vadd.f32 %v104, %v452
    %454 = vmatmul.bf16.gmra.mxu0 %v254
    %v455 = vpop.f32.mrf.mxu0
    %v456 = vadd.f32 %v104, %v455
    %v457 = vpop.f32.mrf.mxu0
    %v458 = vadd.f32 %v104, %v457
    %459 = vmatmul.bf16.gmra.mxu0 %v255
    %v460 = vpop.f32.mrf.mxu0
    %v461 = vadd.f32 %v104, %v460
    %v462 = vpop.f32.mrf.mxu0
    %v463 = vadd.f32 %v104, %v462
    %464 = vmatmul.bf16.gmra.mxu0 %v256
    %v465 = vpop.f32.mrf.mxu0
    %v466 = vadd.f32 %v104, %v465
    %v467 = vpop.f32.mrf.mxu0
    %v468 = vadd.f32 %v104, %v467
    %469 = vmatmul.bf16.gmra.mxu0 %v257
    %v470 = vpop.f32.mrf.mxu0
    %v471 = vadd.f32 %v104, %v470
    %v472 = vpop.f32.mrf.mxu0
    %v473 = vadd.f32 %v104, %v472
    %474 = vmatmul.bf16.gmra.mxu0 %v258
    %v475 = vpop.f32.mrf.mxu0
    %v476 = vadd.f32 %v104, %v475
    %v477 = vpop.f32.mrf.mxu0
    %v478 = vadd.f32 %v104, %v477
    %479 = vmatmul.bf16.gmra.mxu0 %v259
    %v480 = vpop.f32.mrf.mxu0
    %v481 = vadd.f32 %v104, %v480
    %v482 = vpop.f32.mrf.mxu0
    %v483 = vadd.f32 %v104, %v482
    %484 = vmatmul.bf16.gmra.mxu0 %v260
    %v485 = vpop.f32.mrf.mxu0
    %v486 = vadd.f32 %v104, %v485
    %v487 = vpop.f32.mrf.mxu0
    %v488 = vadd.f32 %v104, %v487
    %489 = vmatmul.bf16.gmra.mxu0 %v261
    %v490 = vpop.f32.mrf.mxu0
    %v491 = vadd.f32 %v104, %v490
    %v492 = vpop.f32.mrf.mxu0
    %v493 = vadd.f32 %v104, %v492
    %494 = vmatmul.bf16.gmra.mxu0 %v262
    %v495 = vpop.f32.mrf.mxu0
    %v496 = vadd.f32 %v104, %v495
    %v497 = vpop.f32.mrf.mxu0
    %v498 = vadd.f32 %v104, %v497
    %499 = vmatmul.bf16.gmra.mxu0 %v263
    %v500 = vpop.f32.mrf.mxu0
    %v501 = vadd.f32 %v104, %v500
    %v502 = vpop.f32.mrf.mxu0
    %v503 = vadd.f32 %v104, %v502
    %504 = vmatmul.bf16.gmra.mxu0 %v264
    %v505 = vpop.f32.mrf.mxu0
    %v506 = vadd.f32 %v104, %v505
    %v507 = vpop.f32.mrf.mxu0
    %v508 = vadd.f32 %v104, %v507
    %509 = vmatmul.bf16.gmra.mxu0 %v265
    %v510 = vpop.f32.mrf.mxu0
    %v511 = vadd.f32 %v104, %v510
    %v512 = vpop.f32.mrf.mxu0
    %v513 = vadd.f32 %v104, %v512
    %514 = vdwg.mxu0
    %v515 = vmax.f32 %v356, 0.0
    %v516 = vmax.f32 %v358, 0.0
    %v517 = vmax.f32 %v361, 0.0
    %v518 = vmax.f32 %v363, 0.0
    %v519 = vmax.f32 %v366, 0.0
    %v520 = vmax.f32 %v368, 0.0
    %v521 = vmax.f32 %v371, 0.0
    %v522 = vmax.f32 %v373, 0.0
    %v523 = vmax.f32 %v376, 0.0
    %v524 = vmax.f32 %v378, 0.0
    %v525 = vmax.f32 %v381, 0.0
    %v526 = vmax.f32 %v383, 0.0
    %v527 = vmax.f32 %v386, 0.0
    %v528 = vmax.f32 %v388, 0.0
    %v529 = vmax.f32 %v391, 0.0
    %v530 = vmax.f32 %v393, 0.0
    %v531 = vmax.f32 %v396, 0.0
    %v532 = vmax.f32 %v398, 0.0
    %v533 = vmax.f32 %v401, 0.0
    %v534 = vmax.f32 %v403, 0.0
    %v535 = vmax.f32 %v406, 0.0
    %v536 = vmax.f32 %v408, 0.0
    %v537 = vmax.f32 %v411, 0.0
    %v538 = vmax.f32 %v413, 0.0
    %v539 = vmax.f32 %v416, 0.0
    %v540 = vmax.f32 %v418, 0.0
    %v541 = vmax.f32 %v421, 0.0
    %v542 = vmax.f32 %v423, 0.0
    %v543 = vmax.f32 %v426, 0.0
    %v544 = vmax.f32 %v428, 0.0
    %v545 = vmax.f32 %v431, 0.0
    %v546 = vmax.f32 %v433, 0.0
    %v547 = vmax.f32 %v436, 0.0
    %v548 = vmax.f32 %v438, 0.0
    %v549 = vmax.f32 %v441, 0.0
    %v550 = vmax.f32 %v443, 0.0
    %v551 = vmax.f32 %v446, 0.0
    %v552 = vmax.f32 %v448, 0.0
    %v553 = vmax.f32 %v451, 0.0
    %v554 = vmax.f32 %v453, 0.0
    %v555 = vmax.f32 %v456, 0.0
    %v556 = vmax.f32 %v458, 0.0
    %v557 = vmax.f32 %v461, 0.0
    %v558 = vmax.f32 %v463, 0.0
    %v559 = vmax.f32 %v466, 0.0
    %v560 = vmax.f32 %v468, 0.0
    %v561 = vmax.f32 %v471, 0.0
    %v562 = vmax.f32 %v473, 0.0
    %v563 = vmax.f32 %v476, 0.0
    %v564 = vmax.f32 %v478, 0.0
    %v565 = vmax.f32 %v481, 0.0
    %v566 = vmax.f32 %v483, 0.0
    %v567 = vmax.f32 %v486, 0.0
    %v568 = vmax.f32 %v488, 0.0
    %v569 = vmax.f32 %v491, 0.0
    %v570 = vmax.f32 %v493, 0.0
    %v571 = vmax.f32 %v496, 0.0
    %v572 = vmax.f32 %v498, 0.0
    %v573 = vmax.f32 %v501, 0.0
    %v574 = vmax.f32 %v503, 0.0
    %v575 = vmax.f32 %v506, 0.0
    %v576 = vmax.f32 %v508, 0.0
    %v577 = vmax.f32 %v511, 0.0
    %v578 = vmax.f32 %v513, 0.0
    %vm579 = vcmask 261120
    %v580 = vsel %vm579, %v515, 0.0
    %v581 = vsel %vm579, %v516, 0.0
    %v582 = vadd.f32 %v580, %v581
    %v583 = vsel %vm579, %v517, 0.0
    %v584 = vadd.f32 %v582, %v583
    %v585 = vsel %vm579, %v518, 0.0
    %v586 = vadd.f32 %v584, %v585
    %v587 = vsel %vm579, %v519, 0.0
    %v588 = vadd.f32 %v586, %v587
    %v589 = vsel %vm579, %v520, 0.0
    %v590 = vadd.f32 %v588, %v589
    %v591 = vsel %vm579, %v521, 0.0
    %v592 = vadd.f32 %v590, %v591
    %v593 = vsel %vm579, %v522, 0.0
    %v594 = vadd.f32 %v592, %v593
    %v595 = vsel %vm579, %v523, 0.0
    %v596 = vadd.f32 %v594, %v595
    %v597 = vsel %vm579, %v524, 0.0
    %v598 = vadd.f32 %v596, %v597
    %v599 = vsel %vm579, %v525, 0.0
    %v600 = vadd.f32 %v598, %v599
    %v601 = vsel %vm579, %v526, 0.0
    %v602 = vadd.f32 %v600, %v601
    %v603 = vsel %vm579, %v527, 0.0
    %v604 = vadd.f32 %v602, %v603
    %v605 = vsel %vm579, %v528, 0.0
    %v606 = vadd.f32 %v604, %v605
    %v607 = vsel %vm579, %v529, 0.0
    %v608 = vadd.f32 %v606, %v607
    %v609 = vsel %vm579, %v530, 0.0
    %v610 = vadd.f32 %v608, %v609
    %v611 = vsel %vm579, %v531, 0.0
    %v612 = vadd.f32 %v610, %v611
    %v613 = vsel %vm579, %v532, 0.0
    %v614 = vadd.f32 %v612, %v613
    %v615 = vsel %vm579, %v533, 0.0
    %v616 = vadd.f32 %v614, %v615
    %v617 = vsel %vm579, %v534, 0.0
    %v618 = vadd.f32 %v616, %v617
    %v619 = vsel %vm579, %v535, 0.0
    %v620 = vadd.f32 %v618, %v619
    %v621 = vsel %vm579, %v536, 0.0
    %v622 = vadd.f32 %v620, %v621
    %v623 = vsel %vm579, %v537, 0.0
    %v624 = vadd.f32 %v622, %v623
    %v625 = vsel %vm579, %v538, 0.0
    %v626 = vadd.f32 %v624, %v625
    %v627 = vsel %vm579, %v539, 0.0
    %v628 = vadd.f32 %v626, %v627
    %v629 = vsel %vm579, %v540, 0.0
    %v630 = vadd.f32 %v628, %v629
    %v631 = vsel %vm579, %v541, 0.0
    %v632 = vadd.f32 %v630, %v631
    %v633 = vsel %vm579, %v542, 0.0
    %v634 = vadd.f32 %v632, %v633
    %v635 = vsel %vm579, %v543, 0.0
    %v636 = vadd.f32 %v634, %v635
    %v637 = vsel %vm579, %v544, 0.0
    %v638 = vadd.f32 %v636, %v637
    %v639 = vsel %vm579, %v545, 0.0
    %v640 = vadd.f32 %v638, %v639
    %v641 = vsel %vm579, %v546, 0.0
    %v642 = vadd.f32 %v640, %v641
    %v643 = vrot.slane %v642, 4
    %v644 = vadd.f32 %v642, %v643
    %v645 = vrot.slane %v644, 2
    %v646 = vadd.f32 %v644, %v645
    %v647 = vrot.slane %v646, 1
    %v648 = vadd.f32 %v646, %v647
    %v649 = vsel %vm579, %v547, 0.0
    %v650 = vsel %vm579, %v548, 0.0
    %v651 = vadd.f32 %v649, %v650
    %v652 = vsel %vm579, %v549, 0.0
    %v653 = vadd.f32 %v651, %v652
    %v654 = vsel %vm579, %v550, 0.0
    %v655 = vadd.f32 %v653, %v654
    %v656 = vsel %vm579, %v551, 0.0
    %v657 = vadd.f32 %v655, %v656
    %v658 = vsel %vm579, %v552, 0.0
    %v659 = vadd.f32 %v657, %v658
    %v660 = vsel %vm579, %v553, 0.0
    %v661 = vadd.f32 %v659, %v660
    %v662 = vsel %vm579, %v554, 0.0
    %v663 = vadd.f32 %v661, %v662
    %v664 = vsel %vm579, %v555, 0.0
    %v665 = vadd.f32 %v663, %v664
    %v666 = vsel %vm579, %v556, 0.0
    %v667 = vadd.f32 %v665, %v666
    %v668 = vsel %vm579, %v557, 0.0
    %v669 = vadd.f32 %v667, %v668
    %v670 = vsel %vm579, %v558, 0.0
    %v671 = vadd.f32 %v669, %v670
    %v672 = vsel %vm579, %v559, 0.0
    %v673 = vadd.f32 %v671, %v672
    %v674 = vsel %vm579, %v560, 0.0
    %v675 = vadd.f32 %v673, %v674
    %v676 = vsel %vm579, %v561, 0.0
    %v677 = vadd.f32 %v675, %v676
    %v678 = vsel %vm579, %v562, 0.0
    %v679 = vadd.f32 %v677, %v678
    %v680 = vsel %vm579, %v563, 0.0
    %v681 = vadd.f32 %v679, %v680
    %v682 = vsel %vm579, %v564, 0.0
    %v683 = vadd.f32 %v681, %v682
    %v684 = vsel %vm579, %v565, 0.0
    %v685 = vadd.f32 %v683, %v684
    %v686 = vsel %vm579, %v566, 0.0
    %v687 = vadd.f32 %v685, %v686
    %v688 = vsel %vm579, %v567, 0.0
    %v689 = vadd.f32 %v687, %v688
    %v690 = vsel %vm579, %v568, 0.0
    %v691 = vadd.f32 %v689, %v690
    %v692 = vsel %vm579, %v569, 0.0
    %v693 = vadd.f32 %v691, %v692
    %v694 = vsel %vm579, %v570, 0.0
    %v695 = vadd.f32 %v693, %v694
    %v696 = vsel %vm579, %v571, 0.0
    %v697 = vadd.f32 %v695, %v696
    %v698 = vsel %vm579, %v572, 0.0
    %v699 = vadd.f32 %v697, %v698
    %v700 = vsel %vm579, %v573, 0.0
    %v701 = vadd.f32 %v699, %v700
    %v702 = vsel %vm579, %v574, 0.0
    %v703 = vadd.f32 %v701, %v702
    %v704 = vsel %vm579, %v575, 0.0
    %v705 = vadd.f32 %v703, %v704
    %v706 = vsel %vm579, %v576, 0.0
    %v707 = vadd.f32 %v705, %v706
    %v708 = vsel %vm579, %v577, 0.0
    %v709 = vadd.f32 %v707, %v708
    %v710 = vsel %vm579, %v578, 0.0
    %v711 = vadd.f32 %v709, %v710
    %v712 = vrot.slane %v711, 4
    %v713 = vadd.f32 %v711, %v712
    %v714 = vrot.slane %v713, 2
    %v715 = vadd.f32 %v713, %v714
    %v716 = vrot.slane %v715, 1
    %v717 = vadd.f32 %v715, %v716
    %v718 = vmul.f32 %v648, 0.00390625
    %v719 = vmul.f32 %v717, 0.00390625
    %v720 = vpack.c.bf16 %v718, %v718
    %v721 = vpack.c.bf16 %v719, %v719
    %v722 = vld [vmem:[%s3] sm:$0xf]
    %v723 = vld [vmem:[%s3 + $0x4] sm:$0xf]
    %v724 = vld [vmem:[%s3 + $0x8] sm:$0xf]
    %v725 = vld [vmem:[%s3 + $0xc] sm:$0xf]
    %v726 = vld [vmem:[%s4] sm:$0x1]
    %v728 = vperm.slane %v726, 0
    %v732 = vunpack.c.l.b16 %v720
    %v733 = vunpack.c.l.b16 %v721
    %vm734 = vcmask 1041409
    %v735 = vsel %vm734, %v733, %v732
    %v736 = vpack.c.b16 %v735, %v735
    %v741 = vunpack.c.l.b16 %v722
    %v742 = vunpack.c.l.b16 %v723
    %v743 = vunpack.c.l.b16 %v724
    %v744 = vunpack.c.l.b16 %v725
    %v745 = vpack.c.b16 %v742, %v741
    %v746 = vpack.c.b16 %v744, %v743
    %v750 = vsel %vm579, %v736, 0
    %752 = vmatpush.bf16.msra.mxu0 0
    %753 = vmatpush.bf16.msra.mxu0 0
    %754 = vmatpush.bf16.msra.mxu0 0
    %755 = vmatpush.bf16.msra.mxu0 0
    %756 = vmatpush.bf16.msra.mxu0 0
    %757 = vmatpush.bf16.msra.mxu0 0
    %758 = vmatpush.bf16.msra.mxu0 %v746
    %759 = vmatpush.bf16.msra.mxu0 %v745
    %760 = vmatmul.bf16.gmra.mxu0 %v750
    %v761 = vpop.f32.mrf.mxu0
    %v762 = vadd.f32 %v728, %v761
    %v763 = vpop.f32.mrf.mxu0
    %764 = vdwg.mxu0
    %vm765 = vcmask 58368
    %766 = vst.msk [vmem:[#allocation2] sm:$0x3] %vm765, %v762
    // Predicated region
    $region22: #{gridpg_forward.1} parent=1 // pred_check
      _
    $region23: #{gridpg_forward.1} parent=1 // pred_check_branch
      %768 = sbr.rel (0) target = $region25
    $region24: #{gridpg_forward.1} parent=1 // pred_region
      %770 = vsyncadd [#allocation3], 0
      %s772 = sshll.u32 [#allocation2], 4
      %s773 = int_to_ptr.vmem [resolvable:$true] %s772
      %s774 = sshll.u32 %s5, 4
      %s775 = int_to_ptr.hbm [resolvable:$true] %s774
      %777 = dma.vmem_to_hbm [thread:$0]  %s773, 32, %s775, [#allocation3]
    $region25: #{gridpg_forward.1} parent=1 // pred_fallthru
      _
    // Predicated region
    $region26: #{gridpg_forward.1} parent=1 // pred_check
      _
    $region27: #{gridpg_forward.1} parent=1 // pred_check_branch
      %779 = sbr.rel (0) target = $region29
    $region28: #{gridpg_forward.1} parent=1 // pred_region
      %781 = dma.done [#allocation3], 32
    $region29: #{gridpg_forward.1} parent=1 // pred_fallthru
      _
    %782 = vsyncpa [#allocation3], 1

</llo_original>
